<compile_context>
chip_gen: v7x
topology: tpu7x:2x2x1
jax: 0.10.0
libtpu: 0.0.40
codegen_flags: <defaults>
</compile_context>

<pallas_src>
import functools

import jax
import jax.numpy as jnp
from jax.experimental import pallas as pl
from jax.experimental.pallas import tpu as pltpu

LN_EPS = 1e-5  # PyTorch nn.LayerNorm default
_MiB = 1024 * 1024


def _round_up(a, b):
    return (a + b - 1) // b * b


def _vmem_capacity_bytes():
    """Physical VMEM size; conservative (v7x-sized) fallback if unavailable."""
    try:
        return int(pltpu.get_tpu_info().vmem_capacity_bytes)
    except Exception:
        return 64 * _MiB


def _ffn_kernel(x_ref, w1_ref, b1_ref, w2_ref, b2_ref, o_ref,
                xhat_ref, acc_ref, *, gelu_approximate):
    """Grid = (row_tiles, hidden_chunks).  x/o blocks: (tm, D); w1: (D, th);
    w2: (th, D); b1: (1, th); b2: (1, D)."""
    hk = pl.program_id(1)

    @pl.when(hk == 0)
    def _():
        # ---- LayerNorm statistics in f32 (affine folded into W1/b1). ----
        x = x_ref[...].astype(jnp.float32)
        mean = jnp.mean(x, axis=-1, keepdims=True)
        xc = x - mean
        var = jnp.mean(xc * xc, axis=-1, keepdims=True)
        # Padded (all-zero) tail rows give xc == 0 -> x_hat == 0 (no NaN).
        xhat_ref[...] = (xc * jax.lax.rsqrt(var + LN_EPS)).astype(xhat_ref.dtype)
        acc_ref[...] = jnp.zeros_like(acc_ref)

    # ---- Linear(dim -> hidden) chunk: bf16 operands, f32 MXU accumulation ----
    h = jnp.dot(xhat_ref[...], w1_ref[...], preferred_element_type=jnp.float32)
    h = h + b1_ref[...]

    # ---- GELU: tanh form routes the transcendental to the EUP slot.
    # (approximate=False would match PyTorch's erf exactly but runs a long
    #  VPU polynomial over (tm, th); difference is ~1e-3 absolute.)
    h = jax.nn.gelu(h, approximate=gelu_approximate)

    # Dropout(p=0.0) is the identity -> no-op.

    # ---- Linear(hidden -> dim) chunk, accumulated in f32 ----
    acc_ref[...] += jnp.dot(h.astype(w2_ref.dtype), w2_ref[...],
                            preferred_element_type=jnp.float32)

    @pl.when(hk == pl.num_programs(1) - 1)
    def _():
        o_ref[...] = (acc_ref[...] + b2_ref[...]).astype(o_ref.dtype)


def _plan(M, D, H, x_itemsize, block_rows, hidden_chunk):
    """Static (trace-time) tiling / VMEM plan, generation-aware."""
    cap = _vmem_capacity_bytes()
    big_vmem = cap >= 96 * _MiB          # v5e / v6e: 128 MiB physical VMEM
    if block_rows is None:
        block_rows = 1024 if big_vmem else 512

    # Balanced row tiles (avoid near-2x padded MXU work for ragged M) and at
    # least two grid steps so v7x's two TensorCores both get work.
    num_row_tiles = pl.cdiv(M, block_rows)
    if M >= 16:
        num_row_tiles = max(num_row_tiles, 2)
    tm = _round_up(pl.cdiv(M, num_row_tiles), 8)
    m_pad = tm * num_row_tiles

    # Leave real headroom on v7x (64 MiB physical); use most of v5e/v6e VMEM.
    budget = cap - (20 * _MiB if big_vmem else 12 * _MiB)

    out_itemsize = x_itemsize
    resident = (2 * tm * D * x_itemsize        # input tile, double-buffered
                + 2 * tm * D * out_itemsize    # output tile, double-buffered
                + tm * D * 2                   # bf16 x_hat scratch
                + tm * D * 4                   # f32 accumulator scratch
                + 4 * D * 4)                   # b2 & misc
    # Bytes per unit of hidden-chunk width th:
    #   bf16 W1/W2 chunks (double-buffered) + ~3 f32 copies of (tm, th) + b1.
    per_th = 8 * D + 12 * tm + 8

    if hidden_chunk is not None:
        th = min(H, max(int(hidden_chunk), 128))
        if th < H:
            th = max(128, th // 128 * 128)
    else:
        th_fit = max((budget - resident) // per_th, 128)
        if th_fit >= H:
            th = H                              # fully resident weights
        else:
            n_chunks = pl.cdiv(H, th_fit)       # balanced hidden chunks
            th = _round_up(pl.cdiv(H, n_chunks), 128)
    h_pad = _round_up(H, th) if th < H else H
    num_h = h_pad // th

    if num_h > 1:
        w_bytes = 2 * (2 * D * th) * 2 + 2 * th * 4
        inter_bytes = 3 * tm * th * 4
    else:
        w_bytes = (2 * D * h_pad) * 2 + h_pad * 4
        inter_bytes = 3 * tm * h_pad * 4
    need = resident + w_bytes + inter_bytes
    vmem_limit = int(min(max(int(need * 1.4), 32 * _MiB), budget))

    return dict(tm=tm, m_pad=m_pad, th=th, h_pad=h_pad, vmem_limit=vmem_limit)


@functools.partial(
    jax.jit,
    static_argnames=("tm", "m_pad", "th", "h_pad", "vmem_limit",
                     "gelu_approximate"))
def _ffn_jit(x, gamma, beta, w1, b1, w2, b2, *, tm, m_pad, th, h_pad,
             vmem_limit, gelu_approximate):
    B, N, D = x.shape
    H = w1.shape[-1]
    M = B * N

    # ---- One-time (jit-compiled) weight preprocessing ----
    # Fold the LayerNorm affine into the first Linear:
    #   (x_hat*gamma + beta) @ W1 + b1 == x_hat @ (gamma[:,None]*W1) + (beta@W1 + b1)
    gamma2 = gamma.reshape(1, D).astype(jnp.float32)
    beta2 = beta.reshape(1, D).astype(jnp.float32)
    w1f = w1.astype(jnp.float32)
    w1_eff = gamma2.reshape(D, 1) * w1f
    b1_eff = b1.reshape(1, H).astype(jnp.float32) + beta2 @ w1f
    b2_eff = b2.reshape(1, D).astype(jnp.float32)

    # bf16 matmul operands (MXU-native, halves weight DMA/VMEM); biases f32.
    w1b = w1_eff.astype(jnp.bfloat16)
    w2b = w2.astype(jnp.bfloat16)

    # Pad the hidden dim for even chunking.  Padded W1 columns / b1 entries are
    # zero -> gelu(0) == 0, and the padded W2 rows are zero, so they contribute
    # exactly nothing to the accumulator.
    if h_pad != H:
        w1b = jnp.pad(w1b, ((0, 0), (0, h_pad - H)))
        b1_eff = jnp.pad(b1_eff, ((0, 0), (0, h_pad - H)))
        w2b = jnp.pad(w2b, ((0, h_pad - H), (0, 0)))

    # Flatten tokens; pad the ragged row tail with zero rows (sliced off below).
    x2 = x.reshape(M, D)
    if m_pad != M:
        x2 = jnp.pad(x2, ((0, m_pad - M), (0, 0)))

    num_row_tiles = m_pad // tm
    num_h = h_pad // th
    grid = (num_row_tiles, num_h)

    # Weight operands: double-buffer only if their block index actually changes
    # (num_h > 1); otherwise single-buffer to save VMEM (no re-DMA ever happens).
    def w_spec(shape, idx):
        if num_h > 1:
            return pl.BlockSpec(shape, idx)
        return pl.BlockSpec(shape, idx, pipeline_mode=pl.Buffered(1))

    itemsize = x.dtype.itemsize
    w_stream = (2 * D * h_pad * 2) * (num_row_tiles if num_h > 1 else 1)
    cost = pl.CostEstimate(
        flops=2 * 2 * m_pad * D * h_pad,          # two matmuls
        transcendentals=m_pad * h_pad,            # tanh in GELU
        bytes_accessed=2 * m_pad * D * itemsize + w_stream + (h_pad + 2 * D) * 4,
    )

    kernel = functools.partial(_ffn_kernel, gelu_approximate=gelu_approximate)

    out = pl.pallas_call(
        kernel,
        out_shape=jax.ShapeDtypeStruct((m_pad, D), x.dtype),
        grid_spec=pltpu.PrefetchScalarGridSpec(
            num_scalar_prefetch=0,
            grid=grid,
            in_specs=[
                pl.BlockSpec((tm, D), lambda i, hk: (i, 0)),   # x rows
                w_spec((D, th), lambda i, hk: (0, hk)),        # W1' (bf16)
                w_spec((1, th), lambda i, hk: (0, hk)),        # b1' (f32)
                w_spec((th, D), lambda i, hk: (hk, 0)),        # W2  (bf16)
                pl.BlockSpec((1, D), lambda i, hk: (0, 0),
                             pipeline_mode=pl.Buffered(1)),    # b2 (f32)
            ],
            out_specs=pl.BlockSpec((tm, D), lambda i, hk: (i, 0)),
            scratch_shapes=[
                pltpu.VMEM((tm, D), jnp.bfloat16),   # cached x_hat
                pltpu.VMEM((tm, D), jnp.float32),    # f32 output accumulator
            ],
        ),
        compiler_params=pltpu.CompilerParams(
            dimension_semantics=("parallel", "arbitrary"),
            vmem_limit_bytes=vmem_limit),
        cost_estimate=cost,
    )(x2, w1b, b1_eff, w2b, b2_eff)

    if m_pad != M:
        out = out[:M]
    return out.reshape(B, N, D)


def feedforward(x, gamma, beta, w1, b1, w2, b2, *,
                block_rows=None, hidden_chunk=None, gelu_approximate=True):
    """x: (B, N, D).  w1: (D, H), w2: (H, D); 1-D or 2-D biases/LN params OK.
    Returns (B, N, D) with x.dtype.

    gelu_approximate=True uses the tanh GELU (EUP-friendly, ~1e-3 from erf);
    pass False for bit-level PyTorch nn.GELU() parity at a VPU cost."""
    B, N, D = x.shape
    H = w1.shape[-1]
    cfg = _plan(B * N, D, H, x.dtype.itemsize, block_rows, hidden_chunk)
    return _ffn_jit(x, gamma, beta, w1, b1, w2, b2,
                    gelu_approximate=gelu_approximate, **cfg)


def _reference(x, gamma, beta, w1, b1, w2, b2):
    """Pure-JAX reference with the module's exact semantics (erf GELU, f32)."""
    xf = x.astype(jnp.float32)
    mean = jnp.mean(xf, axis=-1, keepdims=True)
    var = jnp.mean((xf - mean) ** 2, axis=-1, keepdims=True)
    x_ln = (xf - mean) * jax.lax.rsqrt(var + LN_EPS) * gamma + beta
    h = jax.nn.gelu(x_ln @ w1 + b1, approximate=False)
    return (h @ w2 + b2).astype(x.dtype)


if __name__ == "__main__":
    # Small shapes consistent with the module: (batch, seq, dim) tokens.
    B, N, D, HID = 2, 8, 16, 32

    key = jax.random.PRNGKey(0)
    kx, kw1, kb1, kw2, kb2 = jax.random.split(key, 5)

    x = jax.random.normal(kx, (B, N, D), dtype=jnp.float32)

    # PyTorch-convention 1-D params (LayerNorm: ones/zeros; Linear: small).
    gamma = jnp.ones((D,), jnp.float32)
    beta = jnp.zeros((D,), jnp.float32)
    w1 = jax.random.normal(kw1, (D, HID), jnp.float32) * 0.05
    b1 = jax.random.normal(kb1, (HID,), jnp.float32) * 0.01
    w2 = jax.random.normal(kw2, (HID, D), jnp.float32) * 0.05
    b2 = jax.random.normal(kb2, (D,), jnp.float32) * 0.01

    y = feedforward(x, gamma, beta, w1, b1, w2, b2)
    jax.block_until_ready(y)

    y_ref = _reference(x, gamma, beta, w1, b1, w2, b2)
    assert y.shape == (B, N, D)
    # Tolerance covers bf16 matmul operands (f32 accumulation) and the tanh
    # GELU approximation vs. the f32 / erf reference.
    assert jnp.allclose(y, y_ref, atol=2e-2, rtol=2e-2), "mismatch vs reference"

    print("KERNEL_OK")
</pallas_src>

<mosaic_0001>
module attributes {stable_mosaic.version = 11 : i64} {
  func.func @_ffn_kernel(%arg0: i32, %arg1: i32, %arg2: memref<8x16xf32, #tpu.memory_space<vmem>>, %arg3: memref<16x32xbf16, #tpu.memory_space<vmem>>, %arg4: memref<1x32xf32, #tpu.memory_space<vmem>>, %arg5: memref<32x16xbf16, #tpu.memory_space<vmem>>, %arg6: memref<1x16xf32, #tpu.memory_space<vmem>>, %arg7: memref<8x16xf32, #tpu.memory_space<vmem>>, %arg8: memref<8x16xbf16, #tpu.memory_space<vmem>>, %arg9: memref<8x16xf32, #tpu.memory_space<vmem>>) attributes {dimension_semantics = [#tpu.dimension_semantics<parallel>, #tpu.dimension_semantics<arbitrary>], iteration_bounds = array<i64: 2, 1>, scalar_prefetch = 0 : i64, scratch_operands = 2 : i64, tpu.core_type = #tpu.core_type<tc>, window_params = [{transform_indices = @transform_0, window_bounds = array<i64: 8, 16>}, {pipeline_mode = #tpu.pipeline_mode<synchronous>, transform_indices = @transform_1, window_bounds = array<i64: 16, 32>}, {pipeline_mode = #tpu.pipeline_mode<synchronous>, transform_indices = @transform_2, window_bounds = array<i64: 1, 32>}, {pipeline_mode = #tpu.pipeline_mode<synchronous>, transform_indices = @transform_3, window_bounds = array<i64: 32, 16>}, {pipeline_mode = #tpu.pipeline_mode<synchronous>, transform_indices = @transform_4, window_bounds = array<i64: 1, 16>}, {transform_indices = @transform_5, window_bounds = array<i64: 8, 16>}]} {
    %c0_i32 = arith.constant 0 : i32
    %0 = arith.cmpi eq, %arg1, %c0_i32 : i32
    %1 = arith.extui %0 : i1 to i32
    %c0_i32_0 = arith.constant 0 : i32
    %2 = arith.cmpi ne, %1, %c0_i32_0 : i32
    scf.if %2 {
      %c0_19 = arith.constant 0 : index
      %c0_20 = arith.constant 0 : index
      %31 = vector.load %arg2[%c0_19, %c0_20] : memref<8x16xf32, #tpu.memory_space<vmem>>, vector<8x16xf32>
      %cst_21 = arith.constant dense<0.000000e+00> : vector<8xf32>
      %32 = vector.multi_reduction <add>, %31, %cst_21 [1] : vector<8x16xf32> to vector<8xf32>
      %33 = vector.shape_cast %32 : vector<8xf32> to vector<8x1xf32>
      %cst_22 = arith.constant 1.600000e+01 : f32
      %34 = vector.broadcast %cst_22 : f32 to vector<8x1xf32>
      %35 = arith.divf %33, %34 : vector<8x1xf32>
      %36 = vector.broadcast %35 : vector<8x1xf32> to vector<8x16xf32>
      %37 = arith.subf %31, %36 : vector<8x16xf32>
      %38 = arith.mulf %37, %37 : vector<8x16xf32>
      %cst_23 = arith.constant dense<0.000000e+00> : vector<8xf32>
      %39 = vector.multi_reduction <add>, %38, %cst_23 [1] : vector<8x16xf32> to vector<8xf32>
      %40 = vector.shape_cast %39 : vector<8xf32> to vector<8x1xf32>
      %cst_24 = arith.constant 1.600000e+01 : f32
      %41 = vector.broadcast %cst_24 : f32 to vector<8x1xf32>
      %42 = arith.divf %40, %41 : vector<8x1xf32>
      %cst_25 = arith.constant 9.99999974E-6 : f32
      %43 = vector.broadcast %cst_25 : f32 to vector<8x1xf32>
      %44 = arith.addf %42, %43 : vector<8x1xf32>
      %45 = math.rsqrt %44 : vector<8x1xf32>
      %46 = vector.broadcast %45 : vector<8x1xf32> to vector<8x16xf32>
      %47 = arith.mulf %37, %46 : vector<8x16xf32>
      %48 = arith.truncf %47 : vector<8x16xf32> to vector<8x16xbf16>
      %c0_26 = arith.constant 0 : index
      %c0_27 = arith.constant 0 : index
      %49 = vector.load %arg8[%c0_26, %c0_27] : memref<8x16xbf16, #tpu.memory_space<vmem>>, vector<8x16xbf16>
      tpu.vector_store %arg8[%c0_26, %c0_27], %48 {strides = array<i32>} : memref<8x16xbf16, #tpu.memory_space<vmem>>, vector<8x16xbf16>,
      %cst_28 = arith.constant 0.000000e+00 : f32
      %50 = vector.broadcast %cst_28 : f32 to vector<8x16xf32>
      %c0_29 = arith.constant 0 : index
      %c0_30 = arith.constant 0 : index
      %51 = vector.load %arg9[%c0_29, %c0_30] : memref<8x16xf32, #tpu.memory_space<vmem>>, vector<8x16xf32>
      tpu.vector_store %arg9[%c0_29, %c0_30], %50 {strides = array<i32>} : memref<8x16xf32, #tpu.memory_space<vmem>>, vector<8x16xf32>,
    } else {
    }
    %c0 = arith.constant 0 : index
    %c0_1 = arith.constant 0 : index
    %3 = vector.load %arg8[%c0, %c0_1] : memref<8x16xbf16, #tpu.memory_space<vmem>>, vector<8x16xbf16>
    %c0_2 = arith.constant 0 : index
    %c0_3 = arith.constant 0 : index
    %4 = vector.load %arg3[%c0_2, %c0_3] : memref<16x32xbf16, #tpu.memory_space<vmem>>, vector<16x32xbf16>
    %cst = arith.constant dense<0.000000e+00> : vector<8x32xf32>
    %5 = tpu.matmul %3, %4, %cst {dimension_numbers = #tpu.dot_dimension_numbers<[1], [0], [0], [1], [0, 0, 1, 1], [], []>} : vector<8x16xbf16>, vector<16x32xbf16>, vector<8x32xf32> -> vector<8x32xf32>
    %c0_4 = arith.constant 0 : index
    %c0_5 = arith.constant 0 : index
    %6 = vector.load %arg4[%c0_4, %c0_5] : memref<1x32xf32, #tpu.memory_space<vmem>>, vector<1x32xf32>
    %7 = vector.broadcast %6 : vector<1x32xf32> to vector<8x32xf32>
    %8 = arith.addf %5, %7 : vector<8x32xf32>
    %9 = arith.mulf %8, %8 : vector<8x32xf32>
    %10 = arith.mulf %8, %9 : vector<8x32xf32>
    %cst_6 = arith.constant 4.471500e-02 : f32
    %11 = vector.broadcast %cst_6 : f32 to vector<8x32xf32>
    %12 = arith.mulf %11, %10 : vector<8x32xf32>
    %13 = arith.addf %8, %12 : vector<8x32xf32>
    %cst_7 = arith.constant 0.797884583 : f32
    %14 = vector.broadcast %cst_7 : f32 to vector<8x32xf32>
    %15 = arith.mulf %14, %13 : vector<8x32xf32>
    %16 = math.tanh %15 : vector<8x32xf32>
    %cst_8 = arith.constant 1.000000e+00 : f32
    %17 = vector.broadcast %cst_8 : f32 to vector<8x32xf32>
    %18 = arith.addf %17, %16 : vector<8x32xf32>
    %cst_9 = arith.constant 5.000000e-01 : f32
    %19 = vector.broadcast %cst_9 : f32 to vector<8x32xf32>
    %20 = arith.mulf %19, %18 : vector<8x32xf32>
    %21 = arith.mulf %8, %20 : vector<8x32xf32>
    %c0_10 = arith.constant 0 : index
    %c0_11 = arith.constant 0 : index
    %22 = vector.load %arg9[%c0_10, %c0_11] : memref<8x16xf32, #tpu.memory_space<vmem>>, vector<8x16xf32>
    %23 = arith.truncf %21 : vector<8x32xf32> to vector<8x32xbf16>
    %c0_12 = arith.constant 0 : index
    %c0_13 = arith.constant 0 : index
    %24 = vector.load %arg5[%c0_12, %c0_13] : memref<32x16xbf16, #tpu.memory_space<vmem>>, vector<32x16xbf16>
    %cst_14 = arith.constant dense<0.000000e+00> : vector<8x16xf32>
    %25 = tpu.matmul %23, %24, %cst_14 {dimension_numbers = #tpu.dot_dimension_numbers<[1], [0], [0], [1], [0, 0, 1, 1], [], []>} : vector<8x32xbf16>, vector<32x16xbf16>, vector<8x16xf32> -> vector<8x16xf32>
    %26 = arith.addf %22, %25 : vector<8x16xf32>
    %c0_15 = arith.constant 0 : index
    %c0_16 = arith.constant 0 : index
    %27 = vector.load %arg9[%c0_15, %c0_16] : memref<8x16xf32, #tpu.memory_space<vmem>>, vector<8x16xf32>
    tpu.vector_store %arg9[%c0_15, %c0_16], %26 {strides = array<i32>} : memref<8x16xf32, #tpu.memory_space<vmem>>, vector<8x16xf32>,
    %c0_i32_17 = arith.constant 0 : i32
    %28 = arith.cmpi eq, %arg1, %c0_i32_17 : i32
    %29 = arith.extui %28 : i1 to i32
    %c0_i32_18 = arith.constant 0 : i32
    %30 = arith.cmpi ne, %29, %c0_i32_18 : i32
    scf.if %30 {
      %c0_19 = arith.constant 0 : index
      %c0_20 = arith.constant 0 : index
      %31 = vector.load %arg9[%c0_19, %c0_20] : memref<8x16xf32, #tpu.memory_space<vmem>>, vector<8x16xf32>
      %c0_21 = arith.constant 0 : index
      %c0_22 = arith.constant 0 : index
      %32 = vector.load %arg6[%c0_21, %c0_22] : memref<1x16xf32, #tpu.memory_space<vmem>>, vector<1x16xf32>
      %33 = vector.broadcast %32 : vector<1x16xf32> to vector<8x16xf32>
      %34 = arith.addf %31, %33 : vector<8x16xf32>
      %c0_23 = arith.constant 0 : index
      %c0_24 = arith.constant 0 : index
      %35 = vector.load %arg7[%c0_23, %c0_24] : memref<8x16xf32, #tpu.memory_space<vmem>>, vector<8x16xf32>
      tpu.vector_store %arg7[%c0_23, %c0_24], %34 {strides = array<i32>} : memref<8x16xf32, #tpu.memory_space<vmem>>, vector<8x16xf32>,
    } else {
    }
    return
  }
  func.func @transform_0(%arg0: i32, %arg1: i32) -> (i32, i32) {
    %c0_i32 = arith.constant 0 : i32
    %c0_i32_0 = arith.constant 0 : i32
    return %arg0, %c0_i32 : i32, i32
  }
  func.func @transform_1(%arg0: i32, %arg1: i32) -> (i32, i32) {
    %c0_i32 = arith.constant 0 : i32
    %c0_i32_0 = arith.constant 0 : i32
    return %c0_i32, %arg1 : i32, i32
  }
  func.func @transform_2(%arg0: i32, %arg1: i32) -> (i32, i32) {
    %c0_i32 = arith.constant 0 : i32
    %c0_i32_0 = arith.constant 0 : i32
    return %c0_i32, %arg1 : i32, i32
  }
  func.func @transform_3(%arg0: i32, %arg1: i32) -> (i32, i32) {
    %c0_i32 = arith.constant 0 : i32
    %c0_i32_0 = arith.constant 0 : i32
    return %arg1, %c0_i32 : i32, i32
  }
  func.func @transform_4(%arg0: i32, %arg1: i32) -> (i32, i32) {
    %c0_i32 = arith.constant 0 : i32
    %c0_i32_0 = arith.constant 0 : i32
    %c0_i32_1 = arith.constant 0 : i32
    return %c0_i32, %c0_i32_0 : i32, i32
  }
  func.func @transform_5(%arg0: i32, %arg1: i32) -> (i32, i32) {
    %c0_i32 = arith.constant 0 : i32
    %c0_i32_0 = arith.constant 0 : i32
    return %arg0, %c0_i32 : i32, i32
  }
}

</mosaic_0001>

<llo_original>
// kernel: _ffn_jit.1
$region0: #{_ffn_jit.1}
  #allocation0 [shape = 'u32[]', space=smem, size = 0x4, offset = 0x4, fixed_abs, tag = 'smem constant byte address 0x4 - core index']
  #allocation1 [shape = 'u32[144,128]{1,0:T(1,128)}', space=vmem, size = 0x12000, scoped, tag = 'internal scratch']
  #allocation2 [shape = 'bf16[8,16]{1,0:T(8,128)(2,1)}', space=vmem, size = 0x800, scoped, tag = 'scratch operand']
  #allocation3 [shape = 'f32[8,16]{1,0:T(8,128)}', space=vmem, size = 0x1000, scoped, tag = 'scratch operand']
  %s0 = inlined_call_operand.vmem [shape: f32[16,16], index: 0, kind: input, shape index: {}]
  %s1 = inlined_call_operand.vmem [shape: bf16[16,32], index: 1, kind: input, shape index: {}]
  %s2 = inlined_call_operand.vmem [shape: f32[1,32], index: 2, kind: input, shape index: {}]
  %s3 = inlined_call_operand.vmem [shape: bf16[32,16], index: 3, kind: input, shape index: {}]
  %s4 = inlined_call_operand.vmem [shape: f32[1,16], index: 4, kind: input, shape index: {}]
  %s5 = inlined_call_operand.hbm [shape: f32[16,16], index: 5, kind: output, shape index: {}]
  %s6 = sld [smem:[#allocation0]]
  $region61: #{_ffn_jit.1} parent=0
    _
  %s8 = ssub.s32 1, %s6
  %s9 = scalar_select 0, %s8, %s6
  $region1: #{_ffn_jit.1} parent=0
    #allocation4 [shape = 'u8[8192]{0}', space=vmem, size = 0x2000, scoped, tag = 'output window, operand 0']
    #allocation5 [shape = 's32[2]{0}', space=sflag, size = 0x8, scoped, tag = 'scoped memory for _ffn_jit.1']
    %10 = vsyncpa [#allocation5], 0
    %s11 = scalar_lea.sflag [#allocation5], 1
    %12 = vsyncpa %s11, 0
    loop: start=0, step=1, limit=4
    $region2: #{_ffn_jit.1} parent=1 // loop_pre_header
      _
    $region3: #{_ffn_jit.1} parent=1 // loop_header
      %s14 = sphi 0, %s18
      %p15 = scmp.ge.s32.totalorder %s14, 4
      %s21 = sphi 0, %s33
      %s22 = sphi 0, %s29
      %s23 = sphi 0, %s21
      %s24 = sphi 0, %s22
      %s25 = sphi 0, %s23
      %s26 = sphi 0, %s24
      %s36 = sphi 0, %s38
      %s39 = sphi 0, %s36
      %s40 = sphi 0, %s39
      %s56 = sphi 0, %s40
      %s62 = sphi 0, %s64
      %s65 = sphi 0, %s62
      %s66 = sphi 0, %s65
      %s82 = sphi 0, %s66
      %s88 = sphi 0, %s90
      %s91 = sphi 0, %s88
      %s92 = sphi 0, %s91
      %s108 = sphi 0, %s92
      %s114 = sphi 0, %s116
      %s117 = sphi 0, %s114
      %s118 = sphi 0, %s117
      %s134 = sphi 0, %s118
      %s138 = sphi 0, %s138
      %s140 = sphi 0, %s138
      %s141 = sphi 0, %s140
      %s155 = sphi 0, %s141
      %s161 = sphi 0, %s163
      %s164 = sphi 0, %s161
      %s165 = sphi 0, %s164
      %s181 = sphi 0, %s165
    $region4: #{_ffn_jit.1} parent=1 // loop_header_branch
      %17 = sbr.rel (%p15) target = $region8
    $region5: #{_ffn_jit.1} parent=1 // loop_body
      %s19 = ssub.s32 %s14, 1
      %s20 = ssub.s32 %s14, 2
      %s27 = sadd.s32 1, %s22
      %p28 = scmp.ge.s32.totalorder %s27, 1
      %s29 = scalar_select %p28, 0, %s27
      %s30 = sadd.s32 1, %s21
      %s31 = scalar_select %p28, %s30, %s21
      %p32 = scmp.ge.s32.totalorder %s31, 2
      %s33 = scalar_select %p32, 0, %s31
      %s34 = ssub.s32 %s21, %s33
      %p35 = scmp.eq.s32.totalorder %s34, 0
      %s37 = sadd.s32 %s36, 1
      %s38 = scalar_select %p35, %s36, %s37
      %p41 = pneg %p35
      %p42 = scmp.eq.s32.totalorder %s14, 1
      %p43 = por %p41, %p42
      %p44 = scmp.ne.s32.totalorder %s36, %s39
      %p45 = scmp.eq.s32.totalorder %s14, 0
      %p46 = por %p44, %p45
      %p47 = scmp.ne.s32.totalorder %s36, %s39
      %p48 = scmp.eq.s32.totalorder %s19, 1
      %p49 = por %p47, %p48
      %p50 = scmp.ne.s32.totalorder %s39, %s40
      %p51 = scmp.eq.s32.totalorder %s19, 0
      %p52 = por %p50, %p51
      %p53 = scmp.ne.s32.totalorder %s39, %s40
      %p54 = scmp.eq.s32.totalorder %s20, 1
      %p55 = por %p53, %p54
      %p57 = scmp.ne.s32.totalorder %s40, %s56
      %p58 = scmp.eq.s32.totalorder %s20, 0
      %p59 = por %p57, %p58
      %s60 = ssub.s32 %s22, %s29
      %p61 = scmp.eq.s32.totalorder %s60, 0
      %s63 = sadd.s32 %s62, 1
      %s64 = scalar_select %p61, %s62, %s63
      %p67 = pneg %p61
      %p68 = scmp.eq.s32.totalorder %s14, 1
      %p69 = por %p67, %p68
      %p70 = scmp.ne.s32.totalorder %s62, %s65
      %p71 = scmp.eq.s32.totalorder %s14, 0
      %p72 = por %p70, %p71
      %p73 = scmp.ne.s32.totalorder %s62, %s65
      %p74 = scmp.eq.s32.totalorder %s19, 1
      %p75 = por %p73, %p74
      %p76 = scmp.ne.s32.totalorder %s65, %s66
      %p77 = scmp.eq.s32.totalorder %s19, 0
      %p78 = por %p76, %p77
      %p79 = scmp.ne.s32.totalorder %s65, %s66
      %p80 = scmp.eq.s32.totalorder %s20, 1
      %p81 = por %p79, %p80
      %p83 = scmp.ne.s32.totalorder %s66, %s82
      %p84 = scmp.eq.s32.totalorder %s20, 0
      %p85 = por %p83, %p84
      %s86 = ssub.s32 %s22, %s29
      %p87 = scmp.eq.s32.totalorder %s86, 0
      %s89 = sadd.s32 %s88, 1
      %s90 = scalar_select %p87, %s88, %s89
      %p93 = pneg %p87
      %p94 = scmp.eq.s32.totalorder %s14, 1
      %p95 = por %p93, %p94
      %p96 = scmp.ne.s32.totalorder %s88, %s91
      %p97 = scmp.eq.s32.totalorder %s14, 0
      %p98 = por %p96, %p97
      %p99 = scmp.ne.s32.totalorder %s88, %s91
      %p100 = scmp.eq.s32.totalorder %s19, 1
      %p101 = por %p99, %p100
      %p102 = scmp.ne.s32.totalorder %s91, %s92
      %p103 = scmp.eq.s32.totalorder %s19, 0
      %p104 = por %p102, %p103
      %p105 = scmp.ne.s32.totalorder %s91, %s92
      %p106 = scmp.eq.s32.totalorder %s20, 1
      %p107 = por %p105, %p106
      %p109 = scmp.ne.s32.totalorder %s92, %s108
      %p110 = scmp.eq.s32.totalorder %s20, 0
      %p111 = por %p109, %p110
      %s112 = ssub.s32 %s22, %s29
      %p113 = scmp.eq.s32.totalorder %s112, 0
      %s115 = sadd.s32 %s114, 1
      %s116 = scalar_select %p113, %s114, %s115
      %p119 = pneg %p113
      %p120 = scmp.eq.s32.totalorder %s14, 1
      %p121 = por %p119, %p120
      %p122 = scmp.ne.s32.totalorder %s114, %s117
      %p123 = scmp.eq.s32.totalorder %s14, 0
      %p124 = por %p122, %p123
      %p125 = scmp.ne.s32.totalorder %s114, %s117
      %p126 = scmp.eq.s32.totalorder %s19, 1
      %p127 = por %p125, %p126
      %p128 = scmp.ne.s32.totalorder %s117, %s118
      %p129 = scmp.eq.s32.totalorder %s19, 0
      %p130 = por %p128, %p129
      %p131 = scmp.ne.s32.totalorder %s117, %s118
      %p132 = scmp.eq.s32.totalorder %s20, 1
      %p133 = por %p131, %p132
      %p135 = scmp.ne.s32.totalorder %s118, %s134
      %p136 = scmp.eq.s32.totalorder %s20, 0
      %p137 = por %p135, %p136
      %s139 = sadd.s32 %s138, 1
      %p142 = scmp.eq.s32.totalorder %s14, 1
      %p143 = scmp.ne.s32.totalorder %s138, %s140
      %p144 = scmp.eq.s32.totalorder %s14, 0
      %p145 = por %p143, %p144
      %p146 = scmp.ne.s32.totalorder %s138, %s140
      %p147 = scmp.eq.s32.totalorder %s19, 1
      %p148 = por %p146, %p147
      %p149 = scmp.ne.s32.totalorder %s140, %s141
      %p150 = scmp.eq.s32.totalorder %s19, 0
      %p151 = por %p149, %p150
      %p152 = scmp.ne.s32.totalorder %s140, %s141
      %p153 = scmp.eq.s32.totalorder %s20, 1
      %p154 = por %p152, %p153
      %p156 = scmp.ne.s32.totalorder %s141, %s155
      %p157 = scmp.eq.s32.totalorder %s20, 0
      %p158 = por %p156, %p157
      %s159 = ssub.s32 %s21, %s33
      %p160 = scmp.eq.s32.totalorder %s159, 0
      %s162 = sadd.s32 %s161, 1
      %s163 = scalar_select %p160, %s161, %s162
      %p166 = pneg %p160
      %p167 = scmp.eq.s32.totalorder %s14, 1
      %p168 = por %p166, %p167
      %p169 = scmp.ne.s32.totalorder %s161, %s164
      %p170 = scmp.eq.s32.totalorder %s14, 0
      %p171 = por %p169, %p170
      %p172 = scmp.ne.s32.totalorder %s161, %s164
      %p173 = scmp.eq.s32.totalorder %s19, 1
      %p174 = por %p172, %p173
      %p175 = scmp.ne.s32.totalorder %s164, %s165
      %p176 = scmp.eq.s32.totalorder %s19, 0
      %p177 = por %p175, %p176
      %p178 = scmp.ne.s32.totalorder %s164, %s165
      %p179 = scmp.eq.s32.totalorder %s20, 1
      %p180 = por %p178, %p179
      %p182 = scmp.ne.s32.totalorder %s165, %s181
      %p183 = scmp.eq.s32.totalorder %s20, 0
      %p184 = por %p182, %p183
      %p185 = scmp.le.s32.totalorder 1, %s14
      %p186 = scmp.lt.s32.totalorder %s14, 3
      %p187 = pnand %p185, %p186
      %p188 = pneg %p187
      // Predicated region
      $region9: #{_ffn_jit.1} parent=5 // pred_check
        _
      $region10: #{_ffn_jit.1} parent=5 // pred_check_branch
        %190 = sbr.rel (%p187) target = $region12
      $region11: #{_ffn_jit.1} parent=5 // pred_region
        %s191 = ssub.s32 %s14, 1
        // Predicated region
        $region13: #{_ffn_jit.1} parent=11 // pred_check
          %p192 = pneg %p78
        $region14: #{_ffn_jit.1} parent=11 // pred_check_branch
          %194 = sbr.rel (%p192) target = $region16
        $region15: #{_ffn_jit.1} parent=11 // pred_region
          %p195 = scmp.lt.s32.totalorder %s24, 0
          %s196 = scalar_select %p195, %s24, 0
          %s197 = smul.addr %s196, 4
          %s198 = scalar_lea.vmem %s1, %s197
        $region16: #{_ffn_jit.1} parent=11 // pred_fallthru
          _
        // Predicated region
        $region17: #{_ffn_jit.1} parent=11 // pred_check
          %p199 = pneg %p104
        $region18: #{_ffn_jit.1} parent=11 // pred_check_branch
          %201 = sbr.rel (%p199) target = $region20
        $region19: #{_ffn_jit.1} parent=11 // pred_region
          %p202 = scmp.lt.s32.totalorder %s24, 0
          %s203 = scalar_select %p202, %s24, 0
          %s204 = scalar_lea.vmem %s2, %s203
        $region20: #{_ffn_jit.1} parent=11 // pred_fallthru
          _
        // Predicated region
        $region21: #{_ffn_jit.1} parent=11 // pred_check
          %p205 = pneg %p130
        $region22: #{_ffn_jit.1} parent=11 // pred_check_branch
          %207 = sbr.rel (%p205) target = $region24
        $region23: #{_ffn_jit.1} parent=11 // pred_region
          %s208 = smul.u32 4, %s24
          %p209 = scmp.lt.s32.totalorder %s208, 3
          %s210 = scalar_select %p209, %s208, 3
          %s211 = smul.addr %s210, 4
          %s212 = scalar_lea.vmem %s3, %s211
          %s213 = smul.u32 4, %s24
        $region24: #{_ffn_jit.1} parent=11 // pred_fallthru
          _
        // Predicated region
        $region25: #{_ffn_jit.1} parent=11 // pred_check
          %p214 = pneg %p151
        $region26: #{_ffn_jit.1} parent=11 // pred_check_branch
          %216 = sbr.rel (%p214) target = $region28
        $region27: #{_ffn_jit.1} parent=11 // pred_region
          _
        $region28: #{_ffn_jit.1} parent=11 // pred_fallthru
          _
      $region12: #{_ffn_jit.1} parent=5 // pred_fallthru
        _
      %p217 = scmp.lt.s32.totalorder %s14, 2
      // Predicated region
      $region29: #{_ffn_jit.1} parent=5 // pred_check
        %p218 = pneg %p217
      $region30: #{_ffn_jit.1} parent=5 // pred_check_branch
        %220 = sbr.rel (%p218) target = $region32
      $region31: #{_ffn_jit.1} parent=5 // pred_region
        // Predicated region
        $region33: #{_ffn_jit.1} parent=31 // pred_check
          %p221 = pneg %p46
        $region34: #{_ffn_jit.1} parent=31 // pred_check_branch
          %223 = sbr.rel (%p221) target = $region36
        $region35: #{_ffn_jit.1} parent=31 // pred_region
          %p224 = scmp.lt.s32.totalorder %s21, 1
          %s225 = scalar_select %p224, %s21, 1
          %s226 = smul.addr %s225, 8
          %s227 = scalar_lea.vmem %s0, %s226
        $region36: #{_ffn_jit.1} parent=31 // pred_fallthru
          _
      $region32: #{_ffn_jit.1} parent=5 // pred_fallthru
        _
      %p228 = scmp.le.s32.totalorder 1, %s14
      %p229 = scmp.lt.s32.totalorder %s14, 3
      %p230 = pnand %p228, %p229
      %p231 = pneg %p230
      // Predicated region
      $region37: #{_ffn_jit.1} parent=5 // pred_check
        _
      $region38: #{_ffn_jit.1} parent=5 // pred_check_branch
        %233 = sbr.rel (%p230) target = $region40
      $region39: #{_ffn_jit.1} parent=5 // pred_region
        %s234 = ssub.s32 %s14, 1
        %p235 = scmp.lt.s32.totalorder %s23, 1
        %s236 = scalar_select %p235, %s23, 1
        %s237 = smul.addr %s236, 8
        %s238 = scalar_lea.vmem %s0, %s237
        %p239 = pneg %p52
        %p240 = pneg %p49
        %p241 = scmp.lt.s32.totalorder %s24, 0
        %s242 = scalar_select %p241, %s24, 0
        %s243 = smul.addr %s242, 4
        %s244 = scalar_lea.vmem %s1, %s243
        %p245 = pneg %p78
        %p246 = pneg %p75
        %p247 = scmp.lt.s32.totalorder %s24, 0
        %s248 = scalar_select %p247, %s24, 0
        %s249 = scalar_lea.vmem %s2, %s248
        %p250 = pneg %p104
        %p251 = pneg %p101
        %s252 = smul.u32 4, %s24
        %p253 = scmp.lt.s32.totalorder %s252, 3
        %s254 = scalar_select %p253, %s252, 3
        %s255 = smul.addr %s254, 4
        %s256 = scalar_lea.vmem %s3, %s255
        %p257 = pneg %p130
        %p258 = pneg %p127
        %p259 = pneg %p151
        %p260 = pneg %p148
        %p261 = pneg %p177
        %p262 = pneg %p174
        %s263 = sand.u32 %s164, 1
        %s264 = scalar_lea.sflag [#allocation5], %s263
        %s265 = sand.u32 %s164, 1
        %s266 = smul.addr %s265, 8
        %s267 = scalar_lea.vmem [#allocation4], %s266
        %p268 = scmp.lt.s32.totalorder %s23, 1
        %s269 = scalar_select %p268, %s23, 1
        %s270 = smul.addr %s269, 8
        %s271 = scalar_lea.vmem %s0, %s270
        %p272 = scmp.lt.s32.totalorder %s24, 0
        %s273 = scalar_select %p272, %s24, 0
        %s274 = smul.addr %s273, 4
        %s275 = scalar_lea.vmem %s1, %s274
        %p276 = scmp.lt.s32.totalorder %s24, 0
        %s277 = scalar_select %p276, %s24, 0
        %s278 = scalar_lea.vmem %s2, %s277
        %s279 = smul.u32 4, %s24
        %p280 = scmp.lt.s32.totalorder %s279, 3
        %s281 = scalar_select %p280, %s279, 3
        %s282 = smul.addr %s281, 4
        %s283 = scalar_lea.vmem %s3, %s282
        %s284 = smul.u32 4, %s24
        %p286 = scmp.eq.s32.totalorder %s24, 0
        // Predicated region
        $region41: #{_ffn_jit.1} parent=39 // pred_check
          %p287 = pneg %p286
        $region42: #{_ffn_jit.1} parent=39 // pred_check_branch
          %289 = sbr.rel (%p287) target = $region44
        $region43: #{_ffn_jit.1} parent=39 // pred_region
          %v290 = vld [vmem:[%s271] sm:$0xff]
          %vm291 = vcmask 130048
          %v292 = vsel %vm291, %v290, 0.0
          %293 = vadd.xlane.f32.xlu0 %v292
          %v294 = vpop.xlane.xlu0 %293
          %v295 = vrcp.pop 16.0
          %v296 = vmul.f32 %v294, %v295
          %v297 = vsub.f32 %v290, %v296
          %v298 = vmul.f32 %v297, %v297
          %v299 = vsel %vm291, %v298, 0.0
          %300 = vadd.xlane.f32.xlu0 %v299
          %v301 = vpop.xlane.xlu0 %300
          %v302 = vmul.f32 %v301, %v295
          %v303 = vadd.f32 %v302, 1e-05
          %v304 = vrsqrt.pop %v303
          %v305 = vmul.f32 %v297, %v304
          %v306 = vpack.c.bf16 %v305, %v305
          %vm307 = vcmask 125952
          %308 = vst.msk [vmem:[#allocation2] sm:$0xf] %vm307, %v306
          %309 = vst.msk [vmem:[#allocation3] sm:$0xff] %vm291, 0.0
        $region44: #{_ffn_jit.1} parent=39 // pred_fallthru
          _
        %v310 = vld [vmem:[#allocation2] sm:$0xf]
        %v311 = vld [vmem:[%s275] sm:$0xf]
        %v312 = vld [vmem:[%s275 + $0x4] sm:$0xf]
        %v313 = vld [vmem:[%s278] sm:$0x1]
        %v315 = vlaneseq
        %v316 = vshrl.u32 %v315, 7
        %v317 = vsub.s32 0, %v316
        %v318 = vrot.slane %v313, %v317
        %v322 = vunpack.c.l.b16 %v311
        %v323 = vunpack.c.l.b16 %v312
        %v324 = vpack.c.b16 %v323, %v322
        %vm326 = vcmask 130048
        %v328 = vsel %vm326, %v310, 0
        %330 = vmatprep.subr.bf16.mxu0 0
        %331 = vmatpush1.bf16.msra.mxu0 %v324
        %332 = vmatprep.subr.bf16.mxu0 0
        %333 = vmatpush1.bf16.msra.mxu0 0
        %334 = vmatprep.subr.bf16.mxu0 0
        %335 = vmatpush1.bf16.msra.mxu0 0
        %336 = vmatprep.subr.bf16.mxu0 0
        %337 = vmatpush1.bf16.msra.mxu0 0
        %338 = vmatprep.subr.bf16.mxu0 0
        %339 = vmatpush1.bf16.msra.mxu0 0
        %340 = vmatprep.subr.bf16.mxu0 0
        %341 = vmatpush1.bf16.msra.mxu0 0
        %342 = vmatprep.subr.bf16.mxu0 0
        %343 = vmatpush1.bf16.msra.mxu0 0
        %344 = vmatprep.subr.bf16.mxu0 0
        %345 = vmatpush1.bf16.msra.mxu0 0
        %346 = vmatprep.subr.bf16.mxu0 0
        %347 = vmatpush1.bf16.msra.mxu0 0
        %348 = vmatprep.subr.bf16.mxu0 0
        %349 = vmatpush1.bf16.msra.mxu0 0
        %350 = vmatprep.subr.bf16.mxu0 0
        %351 = vmatpush1.bf16.msra.mxu0 0
        %352 = vmatprep.subr.bf16.mxu0 0
        %353 = vmatpush1.bf16.msra.mxu0 0
        %354 = vmatprep.subr.bf16.mxu0 0
        %355 = vmatpush1.bf16.msra.mxu0 0
        %356 = vmatprep.subr.bf16.mxu0 0
        %357 = vmatpush1.bf16.msra.mxu0 0
        %358 = vmatprep.subr.bf16.mxu0 0
        %359 = vmatpush1.bf16.msra.mxu0 0
        %360 = vmatprep.subr.bf16.mxu0 0
        %361 = vmatpush1.bf16.msra.mxu0 0
        %362 = vmatprep.mubr.bf16.mxu0 0
        %363 = vmatmul.mubr.bf16.gmra.mrb[0].mxu0 %v328
        %v364 = vpop.f32.mrb[0].mxu0
        %v365 = vadd.f32 %v318, %v364
        %v366 = vpop.f32.mrb[0].mxu0
        %v367 = vpop.f32.mrb[0].mxu0
        %v368 = vpop.f32.mrb[0].mxu0
        %369 = vdwg.mxu0
        %v370 = vmul.f32 %v365, %v365
        %v371 = vmul.f32 %v365, %v370
        %v372 = vmul.f32 %v371, 0.044715
        %v373 = vadd.f32 %v365, %v372
        %v374 = vmul.f32 %v373, 0.7978846
        %v375 = vtanh.pop %v374
        %v376 = vadd.f32 %v375, 1.0
        %v377 = vmul.f32 %v376, 0.5
        %v378 = vmul.f32 %v365, %v377
        %v379 = vld [vmem:[#allocation3] sm:$0xff]
        %v380 = vpack.c.bf16 %v378, %v378
        %v381 = vld [vmem:[%s283] sm:$0xf]
        %v382 = vld [vmem:[%s283 + $0x4] sm:$0xf]
        %v383 = vld [vmem:[%s283 + $0x8] sm:$0xf]
        %v384 = vld [vmem:[%s283 + $0xc] sm:$0xf]
        %v389 = vunpack.c.l.b16 %v381
        %v390 = vunpack.c.l.b16 %v382
        %v391 = vunpack.c.l.b16 %v383
        %v392 = vunpack.c.l.b16 %v384
        %v393 = vpack.c.b16 %v390, %v389
        %v394 = vpack.c.b16 %v392, %v391
        %vm397 = vcmask 261120
        %v399 = vsel %vm397, %v380, 0
        %401 = vmatprep.subr.bf16.mxu0 0
        %402 = vmatpush1.bf16.msra.mxu0 %v393
        %403 = vmatprep.subr.bf16.mxu0 0
        %404 = vmatpush1.bf16.msra.mxu0 %v394
        %405 = vmatprep.subr.bf16.mxu0 0
        %406 = vmatpush1.bf16.msra.mxu0 0
        %407 = vmatprep.subr.bf16.mxu0 0
        %408 = vmatpush1.bf16.msra.mxu0 0
        %409 = vmatprep.subr.bf16.mxu0 0
        %410 = vmatpush1.bf16.msra.mxu0 0
        %411 = vmatprep.subr.bf16.mxu0 0
        %412 = vmatpush1.bf16.msra.mxu0 0
        %413 = vmatprep.subr.bf16.mxu0 0
        %414 = vmatpush1.bf16.msra.mxu0 0
        %415 = vmatprep.subr.bf16.mxu0 0
        %416 = vmatpush1.bf16.msra.mxu0 0
        %417 = vmatprep.subr.bf16.mxu0 0
        %418 = vmatpush1.bf16.msra.mxu0 0
        %419 = vmatprep.subr.bf16.mxu0 0
        %420 = vmatpush1.bf16.msra.mxu0 0
        %421 = vmatprep.subr.bf16.mxu0 0
        %422 = vmatpush1.bf16.msra.mxu0 0
        %423 = vmatprep.subr.bf16.mxu0 0
        %424 = vmatpush1.bf16.msra.mxu0 0
        %425 = vmatprep.subr.bf16.mxu0 0
        %426 = vmatpush1.bf16.msra.mxu0 0
        %427 = vmatprep.subr.bf16.mxu0 0
        %428 = vmatpush1.bf16.msra.mxu0 0
        %429 = vmatprep.subr.bf16.mxu0 0
        %430 = vmatpush1.bf16.msra.mxu0 0
        %431 = vmatprep.subr.bf16.mxu0 0
        %432 = vmatpush1.bf16.msra.mxu0 0
        %433 = vmatprep.mubr.bf16.mxu0 0
        %434 = vmatmul.mubr.bf16.gmra.mrb[0].mxu0 %v399
        %v435 = vpop.f32.mrb[0].mxu0
        %v436 = vadd.f32 0.0, %v435
        %v437 = vpop.f32.mrb[0].mxu0
        %v438 = vpop.f32.mrb[0].mxu0
        %v439 = vpop.f32.mrb[0].mxu0
        %440 = vdwg.mxu0
        %v441 = vadd.f32 %v379, %v436
        %442 = vst.msk [vmem:[#allocation3] sm:$0xff] %vm326, %v441
        // Predicated region
        $region45: #{_ffn_jit.1} parent=39 // pred_check
          %p443 = pneg %p286
        $region46: #{_ffn_jit.1} parent=39 // pred_check_branch
          %445 = sbr.rel (%p443) target = $region48
        $region47: #{_ffn_jit.1} parent=39 // pred_region
          %v446 = vld [vmem:[#allocation3] sm:$0xff]
          %v447 = vld [vmem:[%s4] sm:$0x1]
          %v449 = vlaneseq
          %v450 = vshrl.u32 %v449, 7
          %v451 = vsub.s32 0, %v450
          %v452 = vrot.slane %v447, %v451
          %v454 = vadd.f32 %v446, %v452
          %455 = vst.msk [vmem:[%s267] sm:$0xff] %vm326, %v454
        $region48: #{_ffn_jit.1} parent=39 // pred_fallthru
          _
        %s456 = sand.u32 %s164, 1
        %s457 = scalar_lea.sflag [#allocation5], %s456
        %s458 = sand.u32 %s164, 1
        %s459 = smul.addr %s458, 8
        %s460 = scalar_lea.vmem [#allocation4], %s459
        // Predicated region
        $region49: #{_ffn_jit.1} parent=39 // pred_check
          %p461 = pneg %p174
        $region50: #{_ffn_jit.1} parent=39 // pred_check_branch
          %463 = sbr.rel (%p461) target = $region52
        $region51: #{_ffn_jit.1} parent=39 // pred_region
          %s465 = ssub.s32 128, 128
          %466 = vsyncadd %s457, %s465
          %s467 = smul.addr %s23, 128
          %s468 = scalar_lea.hbm %s5, %s467
          %s470 = sshll.u32 %s460, 4
          %s471 = int_to_ptr.vmem [resolvable:$true] %s470
          %473 = dma.vmem_to_hbm [thread:$0]  %s471, 128, %s468, %s457
        $region52: #{_ffn_jit.1} parent=39 // pred_fallthru
          _
      $region40: #{_ffn_jit.1} parent=5 // pred_fallthru
        _
      %p474 = scmp.le.s32.totalorder 2, %s14
      // Predicated region
      $region53: #{_ffn_jit.1} parent=5 // pred_check
        %p475 = pneg %p474
      $region54: #{_ffn_jit.1} parent=5 // pred_check_branch
        %477 = sbr.rel (%p475) target = $region56
      $region55: #{_ffn_jit.1} parent=5 // pred_region
        %s478 = ssub.s32 %s14, 2
        // Predicated region
        $region57: #{_ffn_jit.1} parent=55 // pred_check
          %p479 = pneg %p180
        $region58: #{_ffn_jit.1} parent=55 // pred_check_branch
          %481 = sbr.rel (%p479) target = $region60
        $region59: #{_ffn_jit.1} parent=55 // pred_region
          %s482 = sand.u32 %s165, 1
          %s483 = scalar_lea.sflag [#allocation5], %s482
          %s484 = sand.u32 %s165, 1
          %s485 = smul.addr %s484, 8
          %s486 = scalar_lea.vmem [#allocation4], %s485
          %487 = dma.done %s483, 128
        $region60: #{_ffn_jit.1} parent=55 // pred_fallthru
          _
      $region56: #{_ffn_jit.1} parent=5 // pred_fallthru
        _
    $region6: #{_ffn_jit.1} parent=1 // loop_footer
      %s18 = sadd.s32 1, %s14
    $region7: #{_ffn_jit.1} parent=1 // loop_footer_branch
      %13 = sbr.rel target = $region3
    $region8: #{_ffn_jit.1} parent=1 // loop_exit
      _
    %488 = vsyncpa [#allocation5], 1
    %s489 = scalar_lea.sflag [#allocation5], 1
    %490 = vsyncpa %s489, 1

</llo_original>
